<compile_context>
chip_gen: v7x
topology: tpu7x:2x2x1
jax: 0.10.0
libtpu: 0.0.40
codegen_flags: <defaults>
</compile_context>

<pallas_src>
import jax
import jax.numpy as jnp
from jax.experimental import pallas as pl
from jax.experimental.pallas import tpu as pltpu

P = 1000          # branch / trunk output width, fixed by the module
MAX_TB = 512      # max batch-tile rows (VMEM-safe on v5e/v6e/v7x with margin)


def _round_up(x, m):
    return ((x + m - 1) // m) * m


def _cdiv(a, b):
    return -(-a // b)


# ----------------------------------------------------------------------------
# Pallas kernel: fused two-DeepONet forward on one batch tile.
#
# Weight slab layout (rows x L, all f32, all padding exactly zero):
#   rows [0,   L)  : W1_full  - trunk first layer; nonzero only on trunk rows
#   rows [L,  2L)  : W2       - block-diagonal over the two nets
#   rows [2L, 3L)  : W3
#   rows [3L, 4L)  : W4
#   rows [4L, 5L)  : M_full   - pre-contracted bilinear form; nonzero only on
#                               branch rows
#   rows [5L, 5L+8): tail     - b1, b2, b3, b4, v  (one row each, 3 zero rows)
# ----------------------------------------------------------------------------
def possion_onet_kernel(acts_ref, w_ref, out_ref):
    f32 = jnp.float32
    L = acts_ref.shape[1]                 # fused activation / hidden width (64)

    acts = acts_ref[...]                  # (TB, L) f32

    w1 = w_ref[0 * L:1 * L, :]            # (L, L) grid-resident, no per-step cast
    w2 = w_ref[1 * L:2 * L, :]
    w3 = w_ref[2 * L:3 * L, :]
    w4 = w_ref[3 * L:4 * L, :]
    m = w_ref[4 * L:5 * L, :]             # pre-contracted Wb*diag(wl)*W5^T (fused)
    tail = w_ref[5 * L:5 * L + 8, :]
    b1 = tail[0:1, :]
    b2 = tail[1:2, :]
    b3 = tail[2:3, :]
    b4 = tail[3:4, :]
    v = tail[4:5, :]                      # pre-contracted Wb @ (wl * b5)

    # fused trunk MLP (both sub-nets side by side on the lane axis);
    # zero rows in w1 make it ignore the branch columns of `acts`.
    h = jnp.tanh(jnp.dot(acts, w1, preferred_element_type=f32) + b1)
    h = jnp.tanh(jnp.dot(h, w2, preferred_element_type=f32) + b2)
    h = jnp.tanh(jnp.dot(h, w3, preferred_element_type=f32) + b3)
    h = jnp.tanh(jnp.dot(h, w4, preferred_element_type=f32) + b4)

    # branch path after offline P-contraction: g = acts @ M   (TB, L)
    g = jnp.dot(acts, m, preferred_element_type=f32)

    # out = rowsum(g * h) + rowsum(acts * v)  ==  out1 + out2 of the module
    out = jnp.sum(g * h + acts * v, axis=1, keepdims=True)
    out_ref[...] = out.astype(out_ref.dtype)


# ----------------------------------------------------------------------------
# Parameter construction (JAX wrapper side, done once).
# Weights stored pre-transposed as (in_features, out_features); biases and
# last_layer_weights as (1, out_features) rows.
# ----------------------------------------------------------------------------
def init_deeponet_params(key, branch_features, trunk_features, common_features):
    ks = jax.random.split(key, 12)
    scale = 0.1
    return {
        "wb": scale * jax.random.normal(ks[0], (branch_features, P), jnp.float32),
        "w1": scale * jax.random.normal(ks[1], (trunk_features, common_features), jnp.float32),
        "b1": scale * jax.random.normal(ks[2], (1, common_features), jnp.float32),
        "w2": scale * jax.random.normal(ks[3], (common_features, common_features), jnp.float32),
        "b2": scale * jax.random.normal(ks[4], (1, common_features), jnp.float32),
        "w3": scale * jax.random.normal(ks[5], (common_features, common_features), jnp.float32),
        "b3": scale * jax.random.normal(ks[6], (1, common_features), jnp.float32),
        "w4": scale * jax.random.normal(ks[7], (common_features, common_features), jnp.float32),
        "b4": scale * jax.random.normal(ks[8], (1, common_features), jnp.float32),
        "w5": scale * jax.random.normal(ks[9], (common_features, P), jnp.float32),
        "b5": scale * jax.random.normal(ks[10], (1, P), jnp.float32),
        "wl": jax.random.normal(ks[11], (1, P), jnp.float32),   # last_layer_weights
    }


def pack_possion_onet_params(params1, params2):
    """Fuse both DeepONets into one small f32 weight slab, pre-contracting P.

    Activation column convention (shared with the forward wrapper):
      [0, bf1)            branch1 features
      [bf1, bf1+bf2)      branch2 features
      [bf1+bf2, +tf)      trunk features
      rest                zero padding
    """
    hp = jax.lax.Precision.HIGHEST
    p1, p2 = params1, params2
    bf1, bf2 = p1["wb"].shape[0], p2["wb"].shape[0]
    tf = p1["w1"].shape[0]
    assert p2["w1"].shape[0] == tf, "both nets share the same trunk input"
    c1, c2 = p1["w1"].shape[1], p2["w1"].shape[1]

    L = max(_round_up(bf1 + bf2 + tf, 8), _round_up(c1 + c2, 8))

    def put(dst, arr, r, c):
        return dst.at[r:r + arr.shape[0], c:c + arr.shape[1]].set(arr)

    def precontract(p):
        # Offline P-axis contraction in full f32 precision (review item #1/#3).
        wbl = p["wb"] * p["wl"]                                   # (bf, P)
        m = jnp.dot(wbl, p["w5"].T, precision=hp)                 # (bf, c)
        v = jnp.dot(wbl, p["b5"].T, precision=hp)                 # (bf, 1)
        return m, v

    m1, v1 = precontract(p1)
    m2, v2 = precontract(p2)

    w = jnp.zeros((5 * L + 8, L), jnp.float32)
    t0 = bf1 + bf2                                    # trunk rows of W1_full
    w = put(w, p1["w1"], t0, 0)
    w = put(w, p2["w1"], t0, c1)
    w = put(w, p1["w2"], 1 * L, 0)
    w = put(w, p2["w2"], 1 * L + c1, c1)
    w = put(w, p1["w3"], 2 * L, 0)
    w = put(w, p2["w3"], 2 * L + c1, c1)
    w = put(w, p1["w4"], 3 * L, 0)
    w = put(w, p2["w4"], 3 * L + c1, c1)
    w = put(w, m1, 4 * L, 0)
    w = put(w, m2, 4 * L + bf1, c1)
    tb = 5 * L
    w = put(w, p1["b1"], tb + 0, 0)
    w = put(w, p2["b1"], tb + 0, c1)
    w = put(w, p1["b2"], tb + 1, 0)
    w = put(w, p2["b2"], tb + 1, c1)
    w = put(w, p1["b3"], tb + 2, 0)
    w = put(w, p2["b3"], tb + 2, c1)
    w = put(w, p1["b4"], tb + 3, 0)
    w = put(w, p2["b4"], tb + 3, c1)
    w = put(w, v1.T, tb + 4, 0)       # v over branch1 activation columns
    w = put(w, v2.T, tb + 4, bf1)     # v over branch2 activation columns
    return w


# ----------------------------------------------------------------------------
# Forward wrapper (batch-tiled pallas_call).
# ----------------------------------------------------------------------------
@jax.jit
def possion_onet_forward(branch1_input, branch2_input, trunk_input, w_packed):
    L = w_packed.shape[1]
    bf1 = branch1_input.shape[1]
    bf2 = branch2_input.shape[1]
    tf = trunk_input.shape[1]
    assert bf1 + bf2 + tf <= L, "activation slab narrower than packed weights expect"
    B = branch1_input.shape[0]

    # Balanced batch tiles (multiple of 8) that minimize padding (#4) and give
    # >= 2 grid steps when the batch is large enough, so the "parallel" axis
    # can use both v7x TensorCores (#5).
    n_tiles = max(1, _cdiv(B, MAX_TB))
    if B >= 16:
        n_tiles = max(n_tiles, 2)
    TB = _round_up(_cdiv(B, n_tiles), 8)
    BP = n_tiles * TB

    # Single fused activation slab: [branch1 | branch2 | trunk | 0-pad]  (#6)
    acts = jnp.concatenate(
        [branch1_input.astype(jnp.float32),
         branch2_input.astype(jnp.float32),
         trunk_input.astype(jnp.float32)], axis=1)
    acts = jnp.pad(acts, ((0, BP - B), (0, L - (bf1 + bf2 + tf))))

    out = pl.pallas_call(
        possion_onet_kernel,
        out_shape=jax.ShapeDtypeStruct((BP, 1), jnp.float32),
        grid=(n_tiles,),
        in_specs=[
            pl.BlockSpec((TB, L), lambda i: (i, 0)),          # activation tile
            pl.BlockSpec(w_packed.shape, lambda i: (0, 0)),   # resident weight slab
        ],
        out_specs=pl.BlockSpec((TB, 1), lambda i: (i, 0)),
        compiler_params=pltpu.CompilerParams(
            dimension_semantics=("parallel",)),               # shard tiles over TCs
    )(acts, w_packed)
    return out[:B]


# ----------------------------------------------------------------------------
# Pure-JAX reference (original, unfused module math, full f32 precision).
# ----------------------------------------------------------------------------
def possion_onet_reference(branch1_input, branch2_input, trunk_input, params1, params2):
    hp = jax.lax.Precision.HIGHEST

    def one_net(branch, trunk, p):
        bo = jnp.dot(branch, p["wb"], precision=hp)
        h = jnp.tanh(jnp.dot(trunk, p["w1"], precision=hp) + p["b1"])
        h = jnp.tanh(jnp.dot(h, p["w2"], precision=hp) + p["b2"])
        h = jnp.tanh(jnp.dot(h, p["w3"], precision=hp) + p["b3"])
        h = jnp.tanh(jnp.dot(h, p["w4"], precision=hp) + p["b4"])
        to = jnp.dot(h, p["w5"], precision=hp) + p["b5"]
        return jnp.sum(bo * to * p["wl"], axis=1, keepdims=True)

    return one_net(branch1_input, trunk_input, params1) + one_net(
        branch2_input, trunk_input, params2)


if __name__ == "__main__":
    batch = 8
    branch1_features, branch2_features = 16, 32
    trunk_features = 2                    # Poisson-2D trunk input = (x, y)
    common_features1 = common_features2 = 32

    key = jax.random.PRNGKey(0)
    k_b1, k_b2, k_t, k_p1, k_p2, k_big = jax.random.split(key, 6)

    branch1 = jax.random.normal(k_b1, (batch, branch1_features), jnp.float32)
    branch2 = jax.random.normal(k_b2, (batch, branch2_features), jnp.float32)
    trunk = jax.random.normal(k_t, (batch, trunk_features), jnp.float32)

    params1 = init_deeponet_params(k_p1, branch1_features, trunk_features, common_features1)
    params2 = init_deeponet_params(k_p2, branch2_features, trunk_features, common_features2)

    w_packed = pack_possion_onet_params(params1, params2)   # f32, ~84 KiB, resident

    # --- small batch (single grid step) ---
    out = possion_onet_forward(branch1, branch2, trunk, w_packed)
    out = jax.block_until_ready(out)
    ref = possion_onet_reference(branch1, branch2, trunk, params1, params2)
    assert out.shape == (batch, 1), out.shape
    # Re-association of the P-sum (offline pre-contraction) validated at 2e-3.
    assert jnp.allclose(out, ref, atol=2e-3, rtol=2e-3), (out, ref)

    # --- larger batch: exercises balanced multi-tile grid (2 x 152 for B=300) ---
    big_batch = 300
    kb1, kb2, kt = jax.random.split(k_big, 3)
    bb1 = jax.random.normal(kb1, (big_batch, branch1_features), jnp.float32)
    bb2 = jax.random.normal(kb2, (big_batch, branch2_features), jnp.float32)
    bt = jax.random.normal(kt, (big_batch, trunk_features), jnp.float32)
    out_big = possion_onet_forward(bb1, bb2, bt, w_packed)
    out_big = jax.block_until_ready(out_big)
    ref_big = possion_onet_reference(bb1, bb2, bt, params1, params2)
    assert out_big.shape == (big_batch, 1), out_big.shape
    assert jnp.allclose(out_big, ref_big, atol=2e-3, rtol=2e-3), "large-batch mismatch"

    print("KERNEL_OK")
</pallas_src>

<mosaic_0001>
module attributes {stable_mosaic.version = 11 : i64} {
  func.func @possion_onet_kernel(%arg0: i32, %arg1: memref<8x64xf32, #tpu.memory_space<vmem>>, %arg2: memref<328x64xf32, #tpu.memory_space<vmem>>, %arg3: memref<8x1xf32, #tpu.memory_space<vmem>>) attributes {dimension_semantics = [#tpu.dimension_semantics<parallel>], iteration_bounds = array<i64: 1>, scalar_prefetch = 0 : i64, scratch_operands = 0 : i64, tpu.core_type = #tpu.core_type<tc>, window_params = [{transform_indices = @transform_0, window_bounds = array<i64: 8, 64>}, {pipeline_mode = #tpu.pipeline_mode<synchronous>, transform_indices = @transform_1, window_bounds = array<i64: 328, 64>}, {transform_indices = @transform_2, window_bounds = array<i64: 8, 1>}]} {
    %c0 = arith.constant 0 : index
    %c0_0 = arith.constant 0 : index
    %0 = vector.load %arg1[%c0, %c0_0] : memref<8x64xf32, #tpu.memory_space<vmem>>, vector<8x64xf32>
    %c0_1 = arith.constant 0 : index
    %c0_2 = arith.constant 0 : index
    %1 = vector.load %arg2[%c0_1, %c0_2] : memref<328x64xf32, #tpu.memory_space<vmem>>, vector<64x64xf32>
    %c64 = arith.constant 64 : index
    %c0_3 = arith.constant 0 : index
    %2 = vector.load %arg2[%c64, %c0_3] : memref<328x64xf32, #tpu.memory_space<vmem>>, vector<64x64xf32>
    %c128 = arith.constant 128 : index
    %c0_4 = arith.constant 0 : index
    %3 = vector.load %arg2[%c128, %c0_4] : memref<328x64xf32, #tpu.memory_space<vmem>>, vector<64x64xf32>
    %c192 = arith.constant 192 : index
    %c0_5 = arith.constant 0 : index
    %4 = vector.load %arg2[%c192, %c0_5] : memref<328x64xf32, #tpu.memory_space<vmem>>, vector<64x64xf32>
    %c256 = arith.constant 256 : index
    %c0_6 = arith.constant 0 : index
    %5 = vector.load %arg2[%c256, %c0_6] : memref<328x64xf32, #tpu.memory_space<vmem>>, vector<64x64xf32>
    %c320 = arith.constant 320 : index
    %c0_7 = arith.constant 0 : index
    %6 = vector.load %arg2[%c320, %c0_7] : memref<328x64xf32, #tpu.memory_space<vmem>>, vector<8x64xf32>
    %7 = vector.extract_strided_slice %6 {offsets = [0, 0], sizes = [1, 64], strides = [1, 1]} : vector<8x64xf32> to vector<1x64xf32>
    %8 = vector.extract_strided_slice %6 {offsets = [1, 0], sizes = [1, 64], strides = [1, 1]} : vector<8x64xf32> to vector<1x64xf32>
    %9 = vector.extract_strided_slice %6 {offsets = [2, 0], sizes = [1, 64], strides = [1, 1]} : vector<8x64xf32> to vector<1x64xf32>
    %10 = vector.extract_strided_slice %6 {offsets = [3, 0], sizes = [1, 64], strides = [1, 1]} : vector<8x64xf32> to vector<1x64xf32>
    %11 = vector.extract_strided_slice %6 {offsets = [4, 0], sizes = [1, 64], strides = [1, 1]} : vector<8x64xf32> to vector<1x64xf32>
    %cst = arith.constant dense<0.000000e+00> : vector<8x64xf32>
    %12 = tpu.matmul %0, %1, %cst {dimension_numbers = #tpu.dot_dimension_numbers<[1], [0], [0], [1], [0, 0, 1, 1], [], []>} : vector<8x64xf32>, vector<64x64xf32>, vector<8x64xf32> -> vector<8x64xf32>
    %13 = vector.broadcast %7 : vector<1x64xf32> to vector<8x64xf32>
    %14 = arith.addf %12, %13 : vector<8x64xf32>
    %15 = math.tanh %14 : vector<8x64xf32>
    %cst_8 = arith.constant dense<0.000000e+00> : vector<8x64xf32>
    %16 = tpu.matmul %15, %2, %cst_8 {dimension_numbers = #tpu.dot_dimension_numbers<[1], [0], [0], [1], [0, 0, 1, 1], [], []>} : vector<8x64xf32>, vector<64x64xf32>, vector<8x64xf32> -> vector<8x64xf32>
    %17 = vector.broadcast %8 : vector<1x64xf32> to vector<8x64xf32>
    %18 = arith.addf %16, %17 : vector<8x64xf32>
    %19 = math.tanh %18 : vector<8x64xf32>
    %cst_9 = arith.constant dense<0.000000e+00> : vector<8x64xf32>
    %20 = tpu.matmul %19, %3, %cst_9 {dimension_numbers = #tpu.dot_dimension_numbers<[1], [0], [0], [1], [0, 0, 1, 1], [], []>} : vector<8x64xf32>, vector<64x64xf32>, vector<8x64xf32> -> vector<8x64xf32>
    %21 = vector.broadcast %9 : vector<1x64xf32> to vector<8x64xf32>
    %22 = arith.addf %20, %21 : vector<8x64xf32>
    %23 = math.tanh %22 : vector<8x64xf32>
    %cst_10 = arith.constant dense<0.000000e+00> : vector<8x64xf32>
    %24 = tpu.matmul %23, %4, %cst_10 {dimension_numbers = #tpu.dot_dimension_numbers<[1], [0], [0], [1], [0, 0, 1, 1], [], []>} : vector<8x64xf32>, vector<64x64xf32>, vector<8x64xf32> -> vector<8x64xf32>
    %25 = vector.broadcast %10 : vector<1x64xf32> to vector<8x64xf32>
    %26 = arith.addf %24, %25 : vector<8x64xf32>
    %27 = math.tanh %26 : vector<8x64xf32>
    %cst_11 = arith.constant dense<0.000000e+00> : vector<8x64xf32>
    %28 = tpu.matmul %0, %5, %cst_11 {dimension_numbers = #tpu.dot_dimension_numbers<[1], [0], [0], [1], [0, 0, 1, 1], [], []>} : vector<8x64xf32>, vector<64x64xf32>, vector<8x64xf32> -> vector<8x64xf32>
    %29 = arith.mulf %28, %27 : vector<8x64xf32>
    %30 = vector.broadcast %11 : vector<1x64xf32> to vector<8x64xf32>
    %31 = arith.mulf %0, %30 : vector<8x64xf32>
    %32 = arith.addf %29, %31 : vector<8x64xf32>
    %cst_12 = arith.constant dense<0.000000e+00> : vector<8xf32>
    %33 = vector.multi_reduction <add>, %32, %cst_12 [1] : vector<8x64xf32> to vector<8xf32>
    %34 = vector.shape_cast %33 : vector<8xf32> to vector<8x1xf32>
    %c0_13 = arith.constant 0 : index
    %c0_14 = arith.constant 0 : index
    %35 = vector.load %arg3[%c0_13, %c0_14] : memref<8x1xf32, #tpu.memory_space<vmem>>, vector<8x1xf32>
    tpu.vector_store %arg3[%c0_13, %c0_14], %34 {strides = array<i32>} : memref<8x1xf32, #tpu.memory_space<vmem>>, vector<8x1xf32>,
    return
  }
  func.func @transform_0(%arg0: i32) -> (i32, i32) {
    %c0_i32 = arith.constant 0 : i32
    %c0_i32_0 = arith.constant 0 : i32
    return %arg0, %c0_i32 : i32, i32
  }
  func.func @transform_1(%arg0: i32) -> (i32, i32) {
    %c0_i32 = arith.constant 0 : i32
    %c0_i32_0 = arith.constant 0 : i32
    %c0_i32_1 = arith.constant 0 : i32
    return %c0_i32, %c0_i32_0 : i32, i32
  }
  func.func @transform_2(%arg0: i32) -> (i32, i32) {
    %c0_i32 = arith.constant 0 : i32
    %c0_i32_0 = arith.constant 0 : i32
    return %arg0, %c0_i32 : i32, i32
  }
}

</mosaic_0001>

<llo_original>
// kernel: possion_onet_forward.1
$region0: #{possion_onet_forward.1}
  #allocation0 [shape = 'u32[]', space=smem, size = 0x4, offset = 0x4, fixed_abs, tag = 'smem constant byte address 0x4 - core index']
  #allocation1 [shape = 'u32[144,128]{1,0:T(1,128)}', space=vmem, size = 0x12000, scoped, tag = 'internal scratch']
  %s0 = inlined_call_operand.vmem [shape: f32[8,64], index: 0, kind: input, shape index: {}]
  %s1 = inlined_call_operand.vmem [shape: f32[328,64], index: 1, kind: input, shape index: {}]
  %s2 = inlined_call_operand.vmem [shape: f32[8,1], index: 2, kind: output, shape index: {}]
  %s3 = sld [smem:[#allocation0]]
  $region18: #{possion_onet_forward.1} parent=0
    _
  %s5 = ssub.s32 1, %s3
  %s6 = scalar_select 0, %s5, %s3
  // Predicated region
  $region2: #{possion_onet_forward.1} parent=0 // pred_check
    _
  $region3: #{possion_onet_forward.1} parent=0 // pred_check_branch
    %8 = sbr.rel (0) target = $region5
  $region4: #{possion_onet_forward.1} parent=0 // pred_region
    _
  $region5: #{possion_onet_forward.1} parent=0 // pred_fallthru
    _
  // Predicated region
  $region6: #{possion_onet_forward.1} parent=0 // pred_check
    _
  $region7: #{possion_onet_forward.1} parent=0 // pred_check_branch
    %10 = sbr.rel (0) target = $region9
  $region8: #{possion_onet_forward.1} parent=0 // pred_region
    _
  $region9: #{possion_onet_forward.1} parent=0 // pred_fallthru
    _
  %v11 = vld [vmem:[%s0] sm:$0xff]
  %v12 = vld [vmem:[%s1] sm:$0xff]
  %v13 = vld [vmem:[%s1 + $0x8] sm:$0xff]
  %v14 = vld [vmem:[%s1 + $0x10] sm:$0xff]
  %v15 = vld [vmem:[%s1 + $0x18] sm:$0xff]
  %v16 = vld [vmem:[%s1 + $0x20] sm:$0xff]
  %v17 = vld [vmem:[%s1 + $0x28] sm:$0xff]
  %v18 = vld [vmem:[%s1 + $0x30] sm:$0xff]
  %v19 = vld [vmem:[%s1 + $0x38] sm:$0xff]
  %v20 = vld [vmem:[%s1 + $0x40] sm:$0xff]
  %v21 = vld [vmem:[%s1 + $0x48] sm:$0xff]
  %v22 = vld [vmem:[%s1 + $0x50] sm:$0xff]
  %v23 = vld [vmem:[%s1 + $0x58] sm:$0xff]
  %v24 = vld [vmem:[%s1 + $0x60] sm:$0xff]
  %v25 = vld [vmem:[%s1 + $0x68] sm:$0xff]
  %v26 = vld [vmem:[%s1 + $0x70] sm:$0xff]
  %v27 = vld [vmem:[%s1 + $0x78] sm:$0xff]
  %v28 = vld [vmem:[%s1 + $0x80] sm:$0xff]
  %v29 = vld [vmem:[%s1 + $0x88] sm:$0xff]
  %v30 = vld [vmem:[%s1 + $0x90] sm:$0xff]
  %v31 = vld [vmem:[%s1 + $0x98] sm:$0xff]
  %v32 = vld [vmem:[%s1 + $0xa0] sm:$0xff]
  %v33 = vld [vmem:[%s1 + $0xa8] sm:$0xff]
  %v34 = vld [vmem:[%s1 + $0xb0] sm:$0xff]
  %v35 = vld [vmem:[%s1 + $0xb8] sm:$0xff]
  %v36 = vld [vmem:[%s1 + $0xc0] sm:$0xff]
  %v37 = vld [vmem:[%s1 + $0xc8] sm:$0xff]
  %v38 = vld [vmem:[%s1 + $0xd0] sm:$0xff]
  %v39 = vld [vmem:[%s1 + $0xd8] sm:$0xff]
  %v40 = vld [vmem:[%s1 + $0xe0] sm:$0xff]
  %v41 = vld [vmem:[%s1 + $0xe8] sm:$0xff]
  %v42 = vld [vmem:[%s1 + $0xf0] sm:$0xff]
  %v43 = vld [vmem:[%s1 + $0xf8] sm:$0xff]
  %v44 = vld [vmem:[%s1 + $0x100] sm:$0xff]
  %v45 = vld [vmem:[%s1 + $0x108] sm:$0xff]
  %v46 = vld [vmem:[%s1 + $0x110] sm:$0xff]
  %v47 = vld [vmem:[%s1 + $0x118] sm:$0xff]
  %v48 = vld [vmem:[%s1 + $0x120] sm:$0xff]
  %v49 = vld [vmem:[%s1 + $0x128] sm:$0xff]
  %v50 = vld [vmem:[%s1 + $0x130] sm:$0xff]
  %v51 = vld [vmem:[%s1 + $0x138] sm:$0xff]
  %v52 = vld [vmem:[%s1 + $0x140] sm:$0xff]
  %v53 = vlaneseq
  %v54 = vshrl.u32 %v53, 7
  %v55 = vsub.s32 0, %v54
  %v56 = vrot.slane %v52, %v55
  %vm57 = vcmask 523264
  %v59 = vsel %vm57, %v11, 0
  %61 = vmatprep.subr.mxu0 0.0
  %62 = vmatpush1.msra.mxu0 %v12
  %63 = vmatprep.subr.mxu0 0.0
  %64 = vmatpush1.msra.mxu0 %v13
  %65 = vmatprep.subr.mxu0 0.0
  %66 = vmatpush1.msra.mxu0 %v14
  %67 = vmatprep.subr.mxu0 0.0
  %68 = vmatpush1.msra.mxu0 %v15
  %69 = vmatprep.subr.mxu0 0.0
  %70 = vmatpush1.msra.mxu0 %v16
  %71 = vmatprep.subr.mxu0 0.0
  %72 = vmatpush1.msra.mxu0 %v17
  %73 = vmatprep.subr.mxu0 0.0
  %74 = vmatpush1.msra.mxu0 %v18
  %75 = vmatprep.subr.mxu0 0.0
  %76 = vmatpush1.msra.mxu0 %v19
  %77 = vmatprep.subr.mxu0 0.0
  %78 = vmatpush1.msra.mxu0 0.0
  %79 = vmatprep.subr.mxu0 0.0
  %80 = vmatpush1.msra.mxu0 0.0
  %81 = vmatprep.subr.mxu0 0.0
  %82 = vmatpush1.msra.mxu0 0.0
  %83 = vmatprep.subr.mxu0 0.0
  %84 = vmatpush1.msra.mxu0 0.0
  %85 = vmatprep.subr.mxu0 0.0
  %86 = vmatpush1.msra.mxu0 0.0
  %87 = vmatprep.subr.mxu0 0.0
  %88 = vmatpush1.msra.mxu0 0.0
  %89 = vmatprep.subr.mxu0 0.0
  %90 = vmatpush1.msra.mxu0 0.0
  %91 = vmatprep.subr.mxu0 0.0
  %92 = vmatpush1.msra.mxu0 0.0
  %93 = vmatprep.subr.mxu0 0.0
  %94 = vmatpush1.msra.mxu0 0.0
  %95 = vmatprep.subr.mxu0 0.0
  %96 = vmatpush1.msra.mxu0 0.0
  %97 = vmatprep.subr.mxu0 0.0
  %98 = vmatpush1.msra.mxu0 0.0
  %99 = vmatprep.subr.mxu0 0.0
  %100 = vmatpush1.msra.mxu0 0.0
  %101 = vmatprep.subr.mxu0 0.0
  %102 = vmatpush1.msra.mxu0 0.0
  %103 = vmatprep.subr.mxu0 0.0
  %104 = vmatpush1.msra.mxu0 0.0
  %105 = vmatprep.subr.mxu0 0.0
  %106 = vmatpush1.msra.mxu0 0.0
  %107 = vmatprep.subr.mxu0 0.0
  %108 = vmatpush1.msra.mxu0 0.0
  %109 = vmatprep.subr.mxu0 0.0
  %110 = vmatpush1.msra.mxu0 0.0
  %111 = vmatprep.subr.mxu0 0.0
  %112 = vmatpush1.msra.mxu0 0.0
  %113 = vmatprep.subr.mxu0 0.0
  %114 = vmatpush1.msra.mxu0 0.0
  %115 = vmatprep.subr.mxu0 0.0
  %116 = vmatpush1.msra.mxu0 0.0
  %117 = vmatprep.subr.mxu0 0.0
  %118 = vmatpush1.msra.mxu0 0.0
  %119 = vmatprep.subr.mxu0 0.0
  %120 = vmatpush1.msra.mxu0 0.0
  %121 = vmatprep.subr.mxu0 0.0
  %122 = vmatpush1.msra.mxu0 0.0
  %123 = vmatprep.subr.mxu0 0.0
  %124 = vmatpush1.msra.mxu0 0.0
  %125 = vmatprep.mubr.f32.mxu0 0.0
  %126 = vmatmul.mubr.f32.gmra.mrb[0].mxu0 %v59
  %v127 = vpop.f32.mrb[0].mxu0
  %v128 = vadd.f32 %v56, %v127
  %v129 = vpop.f32.mrb[0].mxu0
  %130 = vdwg.mxu0
  %v131 = vtanh.pop %v128
  %v132 = vlaneseq
  %v133 = vshrl.u32 %v132, 7
  %v134 = vsub.s32 1, %v133
  %v135 = vrot.slane %v52, %v134
  %v137 = vsel %vm57, %v131, 0
  %139 = vmatprep.subr.mxu0 0.0
  %140 = vmatpush1.msra.mxu0 %v20
  %141 = vmatprep.subr.mxu0 0.0
  %142 = vmatpush1.msra.mxu0 %v21
  %143 = vmatprep.subr.mxu0 0.0
  %144 = vmatpush1.msra.mxu0 %v22
  %145 = vmatprep.subr.mxu0 0.0
  %146 = vmatpush1.msra.mxu0 %v23
  %147 = vmatprep.subr.mxu0 0.0
  %148 = vmatpush1.msra.mxu0 %v24
  %149 = vmatprep.subr.mxu0 0.0
  %150 = vmatpush1.msra.mxu0 %v25
  %151 = vmatprep.subr.mxu0 0.0
  %152 = vmatpush1.msra.mxu0 %v26
  %153 = vmatprep.subr.mxu0 0.0
  %154 = vmatpush1.msra.mxu0 %v27
  %155 = vmatprep.subr.mxu0 0.0
  %156 = vmatpush1.msra.mxu0 0.0
  %157 = vmatprep.subr.mxu0 0.0
  %158 = vmatpush1.msra.mxu0 0.0
  %159 = vmatprep.subr.mxu0 0.0
  %160 = vmatpush1.msra.mxu0 0.0
  %161 = vmatprep.subr.mxu0 0.0
  %162 = vmatpush1.msra.mxu0 0.0
  %163 = vmatprep.subr.mxu0 0.0
  %164 = vmatpush1.msra.mxu0 0.0
  %165 = vmatprep.subr.mxu0 0.0
  %166 = vmatpush1.msra.mxu0 0.0
  %167 = vmatprep.subr.mxu0 0.0
  %168 = vmatpush1.msra.mxu0 0.0
  %169 = vmatprep.subr.mxu0 0.0
  %170 = vmatpush1.msra.mxu0 0.0
  %171 = vmatprep.subr.mxu0 0.0
  %172 = vmatpush1.msra.mxu0 0.0
  %173 = vmatprep.subr.mxu0 0.0
  %174 = vmatpush1.msra.mxu0 0.0
  %175 = vmatprep.subr.mxu0 0.0
  %176 = vmatpush1.msra.mxu0 0.0
  %177 = vmatprep.subr.mxu0 0.0
  %178 = vmatpush1.msra.mxu0 0.0
  %179 = vmatprep.subr.mxu0 0.0
  %180 = vmatpush1.msra.mxu0 0.0
  %181 = vmatprep.subr.mxu0 0.0
  %182 = vmatpush1.msra.mxu0 0.0
  %183 = vmatprep.subr.mxu0 0.0
  %184 = vmatpush1.msra.mxu0 0.0
  %185 = vmatprep.subr.mxu0 0.0
  %186 = vmatpush1.msra.mxu0 0.0
  %187 = vmatprep.subr.mxu0 0.0
  %188 = vmatpush1.msra.mxu0 0.0
  %189 = vmatprep.subr.mxu0 0.0
  %190 = vmatpush1.msra.mxu0 0.0
  %191 = vmatprep.subr.mxu0 0.0
  %192 = vmatpush1.msra.mxu0 0.0
  %193 = vmatprep.subr.mxu0 0.0
  %194 = vmatpush1.msra.mxu0 0.0
  %195 = vmatprep.subr.mxu0 0.0
  %196 = vmatpush1.msra.mxu0 0.0
  %197 = vmatprep.subr.mxu0 0.0
  %198 = vmatpush1.msra.mxu0 0.0
  %199 = vmatprep.subr.mxu0 0.0
  %200 = vmatpush1.msra.mxu0 0.0
  %201 = vmatprep.subr.mxu0 0.0
  %202 = vmatpush1.msra.mxu0 0.0
  %203 = vmatprep.mubr.f32.mxu0 0.0
  %204 = vmatmul.mubr.f32.gmra.mrb[0].mxu0 %v137
  %v205 = vpop.f32.mrb[0].mxu0
  %v206 = vadd.f32 %v135, %v205
  %v207 = vpop.f32.mrb[0].mxu0
  %208 = vdwg.mxu0
  %v209 = vtanh.pop %v206
  %v210 = vlaneseq
  %v211 = vshrl.u32 %v210, 7
  %v212 = vsub.s32 2, %v211
  %v213 = vrot.slane %v52, %v212
  %v215 = vsel %vm57, %v209, 0
  %217 = vmatprep.subr.mxu0 0.0
  %218 = vmatpush1.msra.mxu0 %v28
  %219 = vmatprep.subr.mxu0 0.0
  %220 = vmatpush1.msra.mxu0 %v29
  %221 = vmatprep.subr.mxu0 0.0
  %222 = vmatpush1.msra.mxu0 %v30
  %223 = vmatprep.subr.mxu0 0.0
  %224 = vmatpush1.msra.mxu0 %v31
  %225 = vmatprep.subr.mxu0 0.0
  %226 = vmatpush1.msra.mxu0 %v32
  %227 = vmatprep.subr.mxu0 0.0
  %228 = vmatpush1.msra.mxu0 %v33
  %229 = vmatprep.subr.mxu0 0.0
  %230 = vmatpush1.msra.mxu0 %v34
  %231 = vmatprep.subr.mxu0 0.0
  %232 = vmatpush1.msra.mxu0 %v35
  %233 = vmatprep.subr.mxu0 0.0
  %234 = vmatpush1.msra.mxu0 0.0
  %235 = vmatprep.subr.mxu0 0.0
  %236 = vmatpush1.msra.mxu0 0.0
  %237 = vmatprep.subr.mxu0 0.0
  %238 = vmatpush1.msra.mxu0 0.0
  %239 = vmatprep.subr.mxu0 0.0
  %240 = vmatpush1.msra.mxu0 0.0
  %241 = vmatprep.subr.mxu0 0.0
  %242 = vmatpush1.msra.mxu0 0.0
  %243 = vmatprep.subr.mxu0 0.0
  %244 = vmatpush1.msra.mxu0 0.0
  %245 = vmatprep.subr.mxu0 0.0
  %246 = vmatpush1.msra.mxu0 0.0
  %247 = vmatprep.subr.mxu0 0.0
  %248 = vmatpush1.msra.mxu0 0.0
  %249 = vmatprep.subr.mxu0 0.0
  %250 = vmatpush1.msra.mxu0 0.0
  %251 = vmatprep.subr.mxu0 0.0
  %252 = vmatpush1.msra.mxu0 0.0
  %253 = vmatprep.subr.mxu0 0.0
  %254 = vmatpush1.msra.mxu0 0.0
  %255 = vmatprep.subr.mxu0 0.0
  %256 = vmatpush1.msra.mxu0 0.0
  %257 = vmatprep.subr.mxu0 0.0
  %258 = vmatpush1.msra.mxu0 0.0
  %259 = vmatprep.subr.mxu0 0.0
  %260 = vmatpush1.msra.mxu0 0.0
  %261 = vmatprep.subr.mxu0 0.0
  %262 = vmatpush1.msra.mxu0 0.0
  %263 = vmatprep.subr.mxu0 0.0
  %264 = vmatpush1.msra.mxu0 0.0
  %265 = vmatprep.subr.mxu0 0.0
  %266 = vmatpush1.msra.mxu0 0.0
  %267 = vmatprep.subr.mxu0 0.0
  %268 = vmatpush1.msra.mxu0 0.0
  %269 = vmatprep.subr.mxu0 0.0
  %270 = vmatpush1.msra.mxu0 0.0
  %271 = vmatprep.subr.mxu0 0.0
  %272 = vmatpush1.msra.mxu0 0.0
  %273 = vmatprep.subr.mxu0 0.0
  %274 = vmatpush1.msra.mxu0 0.0
  %275 = vmatprep.subr.mxu0 0.0
  %276 = vmatpush1.msra.mxu0 0.0
  %277 = vmatprep.subr.mxu0 0.0
  %278 = vmatpush1.msra.mxu0 0.0
  %279 = vmatprep.subr.mxu0 0.0
  %280 = vmatpush1.msra.mxu0 0.0
  %281 = vmatprep.mubr.f32.mxu0 0.0
  %282 = vmatmul.mubr.f32.gmra.mrb[0].mxu0 %v215
  %v283 = vpop.f32.mrb[0].mxu0
  %v284 = vadd.f32 %v213, %v283
  %v285 = vpop.f32.mrb[0].mxu0
  %286 = vdwg.mxu0
  %v287 = vtanh.pop %v284
  %v288 = vlaneseq
  %v289 = vshrl.u32 %v288, 7
  %v290 = vsub.s32 3, %v289
  %v291 = vrot.slane %v52, %v290
  %v293 = vsel %vm57, %v287, 0
  %295 = vmatprep.subr.mxu0 0.0
  %296 = vmatpush1.msra.mxu0 %v36
  %297 = vmatprep.subr.mxu0 0.0
  %298 = vmatpush1.msra.mxu0 %v37
  %299 = vmatprep.subr.mxu0 0.0
  %300 = vmatpush1.msra.mxu0 %v38
  %301 = vmatprep.subr.mxu0 0.0
  %302 = vmatpush1.msra.mxu0 %v39
  %303 = vmatprep.subr.mxu0 0.0
  %304 = vmatpush1.msra.mxu0 %v40
  %305 = vmatprep.subr.mxu0 0.0
  %306 = vmatpush1.msra.mxu0 %v41
  %307 = vmatprep.subr.mxu0 0.0
  %308 = vmatpush1.msra.mxu0 %v42
  %309 = vmatprep.subr.mxu0 0.0
  %310 = vmatpush1.msra.mxu0 %v43
  %311 = vmatprep.subr.mxu0 0.0
  %312 = vmatpush1.msra.mxu0 0.0
  %313 = vmatprep.subr.mxu0 0.0
  %314 = vmatpush1.msra.mxu0 0.0
  %315 = vmatprep.subr.mxu0 0.0
  %316 = vmatpush1.msra.mxu0 0.0
  %317 = vmatprep.subr.mxu0 0.0
  %318 = vmatpush1.msra.mxu0 0.0
  %319 = vmatprep.subr.mxu0 0.0
  %320 = vmatpush1.msra.mxu0 0.0
  %321 = vmatprep.subr.mxu0 0.0
  %322 = vmatpush1.msra.mxu0 0.0
  %323 = vmatprep.subr.mxu0 0.0
  %324 = vmatpush1.msra.mxu0 0.0
  %325 = vmatprep.subr.mxu0 0.0
  %326 = vmatpush1.msra.mxu0 0.0
  %327 = vmatprep.subr.mxu0 0.0
  %328 = vmatpush1.msra.mxu0 0.0
  %329 = vmatprep.subr.mxu0 0.0
  %330 = vmatpush1.msra.mxu0 0.0
  %331 = vmatprep.subr.mxu0 0.0
  %332 = vmatpush1.msra.mxu0 0.0
  %333 = vmatprep.subr.mxu0 0.0
  %334 = vmatpush1.msra.mxu0 0.0
  %335 = vmatprep.subr.mxu0 0.0
  %336 = vmatpush1.msra.mxu0 0.0
  %337 = vmatprep.subr.mxu0 0.0
  %338 = vmatpush1.msra.mxu0 0.0
  %339 = vmatprep.subr.mxu0 0.0
  %340 = vmatpush1.msra.mxu0 0.0
  %341 = vmatprep.subr.mxu0 0.0
  %342 = vmatpush1.msra.mxu0 0.0
  %343 = vmatprep.subr.mxu0 0.0
  %344 = vmatpush1.msra.mxu0 0.0
  %345 = vmatprep.subr.mxu0 0.0
  %346 = vmatpush1.msra.mxu0 0.0
  %347 = vmatprep.subr.mxu0 0.0
  %348 = vmatpush1.msra.mxu0 0.0
  %349 = vmatprep.subr.mxu0 0.0
  %350 = vmatpush1.msra.mxu0 0.0
  %351 = vmatprep.subr.mxu0 0.0
  %352 = vmatpush1.msra.mxu0 0.0
  %353 = vmatprep.subr.mxu0 0.0
  %354 = vmatpush1.msra.mxu0 0.0
  %355 = vmatprep.subr.mxu0 0.0
  %356 = vmatpush1.msra.mxu0 0.0
  %357 = vmatprep.subr.mxu0 0.0
  %358 = vmatpush1.msra.mxu0 0.0
  %359 = vmatprep.mubr.f32.mxu0 0.0
  %360 = vmatmul.mubr.f32.gmra.mrb[0].mxu0 %v293
  %v361 = vpop.f32.mrb[0].mxu0
  %v362 = vadd.f32 %v291, %v361
  %v363 = vpop.f32.mrb[0].mxu0
  %364 = vdwg.mxu0
  %v365 = vtanh.pop %v362
  %366 = vmatprep.subr.mxu0 0.0
  %367 = vmatpush1.msra.mxu0 %v44
  %368 = vmatprep.subr.mxu0 0.0
  %369 = vmatpush1.msra.mxu0 %v45
  %370 = vmatprep.subr.mxu0 0.0
  %371 = vmatpush1.msra.mxu0 %v46
  %372 = vmatprep.subr.mxu0 0.0
  %373 = vmatpush1.msra.mxu0 %v47
  %374 = vmatprep.subr.mxu0 0.0
  %375 = vmatpush1.msra.mxu0 %v48
  %376 = vmatprep.subr.mxu0 0.0
  %377 = vmatpush1.msra.mxu0 %v49
  %378 = vmatprep.subr.mxu0 0.0
  %379 = vmatpush1.msra.mxu0 %v50
  %380 = vmatprep.subr.mxu0 0.0
  %381 = vmatpush1.msra.mxu0 %v51
  %382 = vmatprep.subr.mxu0 0.0
  %383 = vmatpush1.msra.mxu0 0.0
  %384 = vmatprep.subr.mxu0 0.0
  %385 = vmatpush1.msra.mxu0 0.0
  %386 = vmatprep.subr.mxu0 0.0
  %387 = vmatpush1.msra.mxu0 0.0
  %388 = vmatprep.subr.mxu0 0.0
  %389 = vmatpush1.msra.mxu0 0.0
  %390 = vmatprep.subr.mxu0 0.0
  %391 = vmatpush1.msra.mxu0 0.0
  %392 = vmatprep.subr.mxu0 0.0
  %393 = vmatpush1.msra.mxu0 0.0
  %394 = vmatprep.subr.mxu0 0.0
  %395 = vmatpush1.msra.mxu0 0.0
  %396 = vmatprep.subr.mxu0 0.0
  %397 = vmatpush1.msra.mxu0 0.0
  %398 = vmatprep.subr.mxu0 0.0
  %399 = vmatpush1.msra.mxu0 0.0
  %400 = vmatprep.subr.mxu0 0.0
  %401 = vmatpush1.msra.mxu0 0.0
  %402 = vmatprep.subr.mxu0 0.0
  %403 = vmatpush1.msra.mxu0 0.0
  %404 = vmatprep.subr.mxu0 0.0
  %405 = vmatpush1.msra.mxu0 0.0
  %406 = vmatprep.subr.mxu0 0.0
  %407 = vmatpush1.msra.mxu0 0.0
  %408 = vmatprep.subr.mxu0 0.0
  %409 = vmatpush1.msra.mxu0 0.0
  %410 = vmatprep.subr.mxu0 0.0
  %411 = vmatpush1.msra.mxu0 0.0
  %412 = vmatprep.subr.mxu0 0.0
  %413 = vmatpush1.msra.mxu0 0.0
  %414 = vmatprep.subr.mxu0 0.0
  %415 = vmatpush1.msra.mxu0 0.0
  %416 = vmatprep.subr.mxu0 0.0
  %417 = vmatpush1.msra.mxu0 0.0
  %418 = vmatprep.subr.mxu0 0.0
  %419 = vmatpush1.msra.mxu0 0.0
  %420 = vmatprep.subr.mxu0 0.0
  %421 = vmatpush1.msra.mxu0 0.0
  %422 = vmatprep.subr.mxu0 0.0
  %423 = vmatpush1.msra.mxu0 0.0
  %424 = vmatprep.subr.mxu0 0.0
  %425 = vmatpush1.msra.mxu0 0.0
  %426 = vmatprep.subr.mxu0 0.0
  %427 = vmatpush1.msra.mxu0 0.0
  %428 = vmatprep.subr.mxu0 0.0
  %429 = vmatpush1.msra.mxu0 0.0
  %430 = vmatprep.mubr.f32.mxu0 0.0
  %431 = vmatmul.mubr.f32.gmra.mrb[0].mxu0 %v59
  %v432 = vpop.f32.mrb[0].mxu0
  %v433 = vadd.f32 0.0, %v432
  %v434 = vpop.f32.mrb[0].mxu0
  %435 = vdwg.mxu0
  %v436 = vmul.f32 %v433, %v365
  %v437 = vlaneseq
  %v438 = vshrl.u32 %v437, 7
  %v439 = vsub.s32 4, %v438
  %v440 = vrot.slane %v52, %v439
  %v441 = vmul.f32 %v11, %v440
  %v442 = vadd.f32 %v436, %v441
  %v443 = vsel %vm57, %v442, 0.0
  %444 = vadd.xlane.f32.xlu0 %v443
  %v445 = vpop.xlane.xlu0 %444
  %vm446 = vcmask 7168
  %447 = vst.msk [vmem:[%s2] sm:$0xff] %vm446, %v445
  // Predicated region
  $region10: #{possion_onet_forward.1} parent=0 // pred_check
    _
  $region11: #{possion_onet_forward.1} parent=0 // pred_check_branch
    %449 = sbr.rel (0) target = $region13
  $region12: #{possion_onet_forward.1} parent=0 // pred_region
    _
  $region13: #{possion_onet_forward.1} parent=0 // pred_fallthru
    _
  // Predicated region
  $region14: #{possion_onet_forward.1} parent=0 // pred_check
    _
  $region15: #{possion_onet_forward.1} parent=0 // pred_check_branch
    %451 = sbr.rel (0) target = $region17
  $region16: #{possion_onet_forward.1} parent=0 // pred_region
    _
  $region17: #{possion_onet_forward.1} parent=0 // pred_fallthru
    _

</llo_original>
